<compile_context>
chip_gen: v5e
topology: v5e:2x2
jax: 0.10.0
libtpu: 0.0.40
codegen_flags: <defaults>
</compile_context>

<pallas_src>
import jax
import jax.numpy as jnp
from jax.experimental import pallas as pl
from jax.experimental.pallas import tpu as pltpu


def _round_up(v, m):
    return ((v + m - 1) // m) * m


def _min_sublane(dtype):
    # Native second-minor tile height: f32 -> 8 rows, bf16 -> 16, int8/fp8 -> 32.
    return max(8, 32 // jnp.dtype(dtype).itemsize)


def _select_batch_tile(batch, sublane, max_tile=512):
    """Row tile: single step for small batches; even #steps for large ones."""
    if batch <= max_tile:
        return _round_up(batch, sublane)
    steps = -(-batch // max_tile)
    if steps % 2:
        steps += 1  # even step count -> both v7x TensorCores get equal work
    return _round_up(-(-batch // steps), sublane)


def _vmem_budget_bytes():
    # 75% of physical VMEM: ~96 MiB on v5e/v6e (128 MiB), ~48 MiB on v7x (64 MiB).
    try:
        cap = int(pltpu.get_tpu_info().vmem_capacity_bytes)
    except Exception:
        cap = 64 * 1024 * 1024  # conservative fallback (v7x physical)
    return (3 * cap) // 4


def resmlp_kernel(x_ref, w1_ref, b1_ref, w2_ref, b2_ref, o_ref):
    # x_ref:  (TB, IN)     pipelined batch tile
    # w1_ref: (IN, FEAT)   input_layer weight (transposed vs. torch), resident
    # b1_ref: (1, FEAT)    input_layer bias
    # w2_ref: (FEAT, IN)   output_layer weight (transposed vs. torch), resident
    # b2_ref: (1, IN)      output_layer bias
    x = x_ref[...]  # keep input dtype: bf16 stays on the fast bf16 MXU path

    # hidden = relu(x @ W1 + b1): MXU in input dtype, f32 accumulation.
    h = jnp.dot(x, w1_ref[...], preferred_element_type=jnp.float32)
    h = jnp.maximum(h + b1_ref[...].astype(jnp.float32), 0.0)

    # out = relu(h @ W2 + b2 + x): second matmul in the weight dtype,
    # bias + residual added on the f32 accumulator.
    y = jnp.dot(h.astype(w2_ref.dtype), w2_ref[...],
                preferred_element_type=jnp.float32)
    y = y + b2_ref[...].astype(jnp.float32) + x.astype(jnp.float32)
    o_ref[...] = jnp.maximum(y, 0.0).astype(o_ref.dtype)


def resmlp_forward(x, w1, b1, w2, b2, *, max_tile=512):
    """Fused ResMLP forward (jit-compatible).

    x: (B, IN); w1: (IN, FEAT); b1: (FEAT,); w2: (FEAT, IN); b2: (IN,).
    """
    B, IN = x.shape
    FEAT = w1.shape[1]
    assert w1.shape == (IN, FEAT) and w2.shape == (FEAT, IN)
    assert b1.shape == (FEAT,) and b2.shape == (IN,)

    sublane = _min_sublane(x.dtype)
    tb = _select_batch_tile(B, sublane, max_tile)

    # VMEM budget: double-buffered resident weights + double-buffered x/out
    # tiles + the f32 intermediates of the two accumulations.
    budget = _vmem_budget_bytes()
    p_item = jnp.dtype(w1.dtype).itemsize
    x_item = jnp.dtype(x.dtype).itemsize
    weight_bytes = 2 * (w1.size + w2.size + b1.size + b2.size) * p_item

    def _tile_bytes(t):
        return 2 * 2 * t * IN * x_item + t * (FEAT + IN) * 4

    while tb > sublane and weight_bytes + _tile_bytes(tb) > budget:
        tb = _round_up(tb // 2, sublane)
    if weight_bytes + _tile_bytes(tb) > budget:
        # TODO(synk): add a FEAT-tiled ("arbitrary") grid axis with a VMEM f32
        # accumulator once the weights alone exceed the resident-VMEM budget.
        raise ValueError("ResMLP weights exceed the resident-VMEM budget")

    b_p = _round_up(B, tb)
    x_p = x if b_p == B else jnp.pad(x, ((0, b_p - B), (0, 0)))

    b1_2d = b1.reshape(1, FEAT)
    b2_2d = b2.reshape(1, IN)

    # Advisory cost from the true (unpadded) sizes.
    cost = pl.CostEstimate(
        flops=2 * B * IN * FEAT * 2,
        transcendentals=0,
        bytes_accessed=2 * B * IN * x_item
        + (w1.size + w2.size + b1.size + b2.size) * p_item,
    )

    out_p = pl.pallas_call(
        resmlp_kernel,
        out_shape=jax.ShapeDtypeStruct((b_p, IN), x.dtype),
        grid_spec=pltpu.PrefetchScalarGridSpec(
            num_scalar_prefetch=0,
            grid=(b_p // tb,),
            in_specs=[
                pl.BlockSpec((tb, IN), lambda i: (i, 0)),     # x tile (pipelined)
                pl.BlockSpec((IN, FEAT), lambda i: (0, 0)),   # W1 (resident)
                pl.BlockSpec((1, FEAT), lambda i: (0, 0)),    # b1
                pl.BlockSpec((FEAT, IN), lambda i: (0, 0)),   # W2 (resident)
                pl.BlockSpec((1, IN), lambda i: (0, 0)),      # b2
            ],
            out_specs=pl.BlockSpec((tb, IN), lambda i: (i, 0)),
        ),
        compiler_params=pltpu.CompilerParams(
            dimension_semantics=("parallel",),
            vmem_limit_bytes=budget,
        ),
        cost_estimate=cost,
    )(x_p, w1, b1_2d, w2, b2_2d)

    return out_p if b_p == B else out_p[:B]


def make_resmlp(w1, b1, w2, b2, *, param_dtype=None, max_tile=512):
    """One-time parameter prep (cast), returns a jitted forward over x only."""
    if param_dtype is not None:
        w1, b1, w2, b2 = (jnp.asarray(a, param_dtype) for a in (w1, b1, w2, b2))
    else:
        w1, b1, w2, b2 = map(jnp.asarray, (w1, b1, w2, b2))

    @jax.jit
    def forward(x):
        return resmlp_forward(x, w1, b1, w2, b2, max_tile=max_tile)

    return forward


def resmlp_reference(x, w1, b1, w2, b2):
    h = jnp.maximum(x @ w1 + b1, 0.0)
    y = h @ w2 + b2
    return jnp.maximum(y + x, 0.0)


if __name__ == "__main__":
    INPUT_SIZE = 32
    FEATURE_SIZE = 64
    BATCH = 16

    key = jax.random.PRNGKey(0)
    kx, kw1, kb1, kw2, kb2 = jax.random.split(key, 5)

    # Deterministic init mimicking torch.nn.Linear defaults:
    # uniform(-1/sqrt(fan_in), 1/sqrt(fan_in)); weights stored transposed (in, out).
    bound1 = 1.0 / (INPUT_SIZE ** 0.5)
    bound2 = 1.0 / (FEATURE_SIZE ** 0.5)
    w1 = jax.random.uniform(kw1, (INPUT_SIZE, FEATURE_SIZE), jnp.float32,
                            minval=-bound1, maxval=bound1)
    b1 = jax.random.uniform(kb1, (FEATURE_SIZE,), jnp.float32,
                            minval=-bound1, maxval=bound1)
    w2 = jax.random.uniform(kw2, (FEATURE_SIZE, INPUT_SIZE), jnp.float32,
                            minval=-bound2, maxval=bound2)
    b2 = jax.random.uniform(kb2, (INPUT_SIZE,), jnp.float32,
                            minval=-bound2, maxval=bound2)

    x = jax.random.normal(kx, (BATCH, INPUT_SIZE), jnp.float32)

    # f32 path: exact check against a pure-JAX reference.
    fwd = make_resmlp(w1, b1, w2, b2)
    out = jax.block_until_ready(fwd(x))
    ref = resmlp_reference(x, w1, b1, w2, b2)
    assert out.shape == (BATCH, INPUT_SIZE)
    assert jnp.allclose(out, ref, atol=1e-5, rtol=1e-5)

    # Odd batch (exercises the fused batch pad + slice under jit).
    x_odd = x[:5]
    out_odd = jax.block_until_ready(fwd(x_odd))
    ref_odd = resmlp_reference(x_odd, w1, b1, w2, b2)
    assert out_odd.shape == (5, INPUT_SIZE)
    assert jnp.allclose(out_odd, ref_odd, atol=1e-5, rtol=1e-5)

    # bf16 smoke test: bf16 params + activations (fast bf16 MXU path, f32 accum).
    fwd_bf16 = make_resmlp(w1, b1, w2, b2, param_dtype=jnp.bfloat16)
    out_bf16 = jax.block_until_ready(fwd_bf16(x.astype(jnp.bfloat16)))
    assert out_bf16.shape == (BATCH, INPUT_SIZE)
    assert out_bf16.dtype == jnp.bfloat16
    assert jnp.allclose(out_bf16.astype(jnp.float32), ref, atol=1e-1, rtol=1e-1)

    print("KERNEL_OK")
</pallas_src>

<mosaic_0001>
module attributes {stable_mosaic.version = 11 : i64} {
  func.func @resmlp_kernel(%arg0: i32, %arg1: memref<16x32xf32, #tpu.memory_space<vmem>>, %arg2: memref<32x64xf32, #tpu.memory_space<vmem>>, %arg3: memref<1x64xf32, #tpu.memory_space<vmem>>, %arg4: memref<64x32xf32, #tpu.memory_space<vmem>>, %arg5: memref<1x32xf32, #tpu.memory_space<vmem>>, %arg6: memref<16x32xf32, #tpu.memory_space<vmem>>) attributes {dimension_semantics = [#tpu.dimension_semantics<parallel>], iteration_bounds = array<i64: 1>, scalar_prefetch = 0 : i64, scratch_operands = 0 : i64, tpu.core_type = #tpu.core_type<tc>, window_params = [{transform_indices = @transform_0, window_bounds = array<i64: 16, 32>}, {pipeline_mode = #tpu.pipeline_mode<synchronous>, transform_indices = @transform_1, window_bounds = array<i64: 32, 64>}, {pipeline_mode = #tpu.pipeline_mode<synchronous>, transform_indices = @transform_2, window_bounds = array<i64: 1, 64>}, {pipeline_mode = #tpu.pipeline_mode<synchronous>, transform_indices = @transform_3, window_bounds = array<i64: 64, 32>}, {pipeline_mode = #tpu.pipeline_mode<synchronous>, transform_indices = @transform_4, window_bounds = array<i64: 1, 32>}, {transform_indices = @transform_5, window_bounds = array<i64: 16, 32>}]} {
    %c0 = arith.constant 0 : index
    %c0_0 = arith.constant 0 : index
    %0 = vector.load %arg1[%c0, %c0_0] : memref<16x32xf32, #tpu.memory_space<vmem>>, vector<16x32xf32>
    %c0_1 = arith.constant 0 : index
    %c0_2 = arith.constant 0 : index
    %1 = vector.load %arg2[%c0_1, %c0_2] : memref<32x64xf32, #tpu.memory_space<vmem>>, vector<32x64xf32>
    %cst = arith.constant dense<0.000000e+00> : vector<16x64xf32>
    %2 = tpu.matmul %0, %1, %cst {dimension_numbers = #tpu.dot_dimension_numbers<[1], [0], [0], [1], [0, 0, 1, 1], [], []>} : vector<16x32xf32>, vector<32x64xf32>, vector<16x64xf32> -> vector<16x64xf32>
    %c0_3 = arith.constant 0 : index
    %c0_4 = arith.constant 0 : index
    %3 = vector.load %arg3[%c0_3, %c0_4] : memref<1x64xf32, #tpu.memory_space<vmem>>, vector<1x64xf32>
    %4 = vector.broadcast %3 : vector<1x64xf32> to vector<16x64xf32>
    %5 = arith.addf %2, %4 : vector<16x64xf32>
    %cst_5 = arith.constant 0.000000e+00 : f32
    %6 = vector.broadcast %cst_5 : f32 to vector<16x64xf32>
    %7 = arith.maximumf %5, %6 : vector<16x64xf32>
    %c0_6 = arith.constant 0 : index
    %c0_7 = arith.constant 0 : index
    %8 = vector.load %arg4[%c0_6, %c0_7] : memref<64x32xf32, #tpu.memory_space<vmem>>, vector<64x32xf32>
    %cst_8 = arith.constant dense<0.000000e+00> : vector<16x32xf32>
    %9 = tpu.matmul %7, %8, %cst_8 {dimension_numbers = #tpu.dot_dimension_numbers<[1], [0], [0], [1], [0, 0, 1, 1], [], []>} : vector<16x64xf32>, vector<64x32xf32>, vector<16x32xf32> -> vector<16x32xf32>
    %c0_9 = arith.constant 0 : index
    %c0_10 = arith.constant 0 : index
    %10 = vector.load %arg5[%c0_9, %c0_10] : memref<1x32xf32, #tpu.memory_space<vmem>>, vector<1x32xf32>
    %11 = vector.broadcast %10 : vector<1x32xf32> to vector<16x32xf32>
    %12 = arith.addf %9, %11 : vector<16x32xf32>
    %13 = arith.addf %12, %0 : vector<16x32xf32>
    %cst_11 = arith.constant 0.000000e+00 : f32
    %14 = vector.broadcast %cst_11 : f32 to vector<16x32xf32>
    %15 = arith.maximumf %13, %14 : vector<16x32xf32>
    %c0_12 = arith.constant 0 : index
    %c0_13 = arith.constant 0 : index
    %16 = vector.load %arg6[%c0_12, %c0_13] : memref<16x32xf32, #tpu.memory_space<vmem>>, vector<16x32xf32>
    tpu.vector_store %arg6[%c0_12, %c0_13], %15 {strides = array<i32>} : memref<16x32xf32, #tpu.memory_space<vmem>>, vector<16x32xf32>,
    return
  }
  func.func @transform_0(%arg0: i32) -> (i32, i32) {
    %c0_i32 = arith.constant 0 : i32
    %c0_i32_0 = arith.constant 0 : i32
    return %arg0, %c0_i32 : i32, i32
  }
  func.func @transform_1(%arg0: i32) -> (i32, i32) {
    %c0_i32 = arith.constant 0 : i32
    %c0_i32_0 = arith.constant 0 : i32
    %c0_i32_1 = arith.constant 0 : i32
    return %c0_i32, %c0_i32_0 : i32, i32
  }
  func.func @transform_2(%arg0: i32) -> (i32, i32) {
    %c0_i32 = arith.constant 0 : i32
    %c0_i32_0 = arith.constant 0 : i32
    %c0_i32_1 = arith.constant 0 : i32
    return %c0_i32, %c0_i32_0 : i32, i32
  }
  func.func @transform_3(%arg0: i32) -> (i32, i32) {
    %c0_i32 = arith.constant 0 : i32
    %c0_i32_0 = arith.constant 0 : i32
    %c0_i32_1 = arith.constant 0 : i32
    return %c0_i32, %c0_i32_0 : i32, i32
  }
  func.func @transform_4(%arg0: i32) -> (i32, i32) {
    %c0_i32 = arith.constant 0 : i32
    %c0_i32_0 = arith.constant 0 : i32
    %c0_i32_1 = arith.constant 0 : i32
    return %c0_i32, %c0_i32_0 : i32, i32
  }
  func.func @transform_5(%arg0: i32) -> (i32, i32) {
    %c0_i32 = arith.constant 0 : i32
    %c0_i32_0 = arith.constant 0 : i32
    return %arg0, %c0_i32 : i32, i32
  }
}

</mosaic_0001>

<llo_original>
// kernel: forward.1
$region0: #{forward.1}
  #allocation0 [shape = 'u32[]', space=smem, size = 0x4, offset = 0x4, fixed_abs, tag = 'smem constant byte address 0x4 - core index']
  #allocation1 [shape = 'u32[72,128]{1,0:T(1,128)}', space=vmem, size = 0x9000, scoped, tag = 'internal scratch']
  %s0 = inlined_call_operand.hbm [shape: f32[16,32], index: 0, kind: input, shape index: {}]
  %s1 = inlined_call_operand.hbm [shape: f32[32,64], index: 1, kind: input, shape index: {}]
  %s2 = inlined_call_operand.vmem [shape: f32[1,64], index: 2, kind: input, shape index: {}]
  %s3 = inlined_call_operand.hbm [shape: f32[64,32], index: 3, kind: input, shape index: {}]
  %s4 = inlined_call_operand.vmem [shape: f32[1,32], index: 4, kind: input, shape index: {}]
  %s5 = inlined_call_operand.hbm [shape: f32[16,32], index: 5, kind: output, shape index: {}]
  %s6 = sld [smem:[#allocation0]]
  $region42: #{forward.1} parent=0
    _
  %s8 = ssub.s32 1, %s6
  %s9 = scalar_select 0, %s8, %s6
  $region1: #{forward.1} parent=0
    #allocation2 [shape = 'u8[8192]{0}', space=vmem, size = 0x2000, scoped, tag = 'input window, operand 0, single buffered']
    #allocation3 [shape = 's32[1]{0}', space=sflag, size = 0x4, scoped, tag = 'scoped memory for forward.1']
    #allocation4 [shape = 's32[1]{0}', space=sflag, size = 0x4, scoped, tag = 'scoped memory for forward.1']
    #allocation5 [shape = 'u8[16384]{0}', space=vmem, size = 0x4000, scoped, tag = 'input window, operand 1, single buffered']
    #allocation6 [shape = 's32[1]{0}', space=sflag, size = 0x4, scoped, tag = 'scoped memory for forward.1']
    #allocation7 [shape = 'u8[32768]{0}', space=vmem, size = 0x8000, scoped, tag = 'input window, operand 3, single buffered']
    #allocation8 [shape = 'u8[8192]{0}', space=vmem, size = 0x2000, scoped, tag = 'output window, operand 0, single buffered']
    %10 = vsyncpa [#allocation3], 0
    %11 = vsyncpa [#allocation6], 0
    %12 = vsyncpa [#allocation4], 0
    // Predicated region
    $region2: #{forward.1} parent=1 // pred_check
      _
    $region3: #{forward.1} parent=1 // pred_check_branch
      %14 = sbr.rel (0) target = $region5
    $region4: #{forward.1} parent=1 // pred_region
      %16 = vsyncadd [#allocation3], 0
      %s17 = sshll.u32 %s0, 4
      %s18 = int_to_ptr.hbm [resolvable:$true] %s17
      %s19 = sshll.u32 [#allocation2], 4
      %s20 = int_to_ptr.vmem [resolvable:$true] %s19
      %25 = dma.hbm_to_vmem [thread:$0]  %s18, 256, %s20, [#allocation3], 128, 128, 8
    $region5: #{forward.1} parent=1 // pred_fallthru
      _
    // Predicated region
    $region6: #{forward.1} parent=1 // pred_check
      _
    $region7: #{forward.1} parent=1 // pred_check_branch
      %27 = sbr.rel (0) target = $region9
    $region8: #{forward.1} parent=1 // pred_region
      %29 = vsyncadd [#allocation6], 0
      %s30 = sshll.u32 %s1, 4
      %s31 = int_to_ptr.hbm [resolvable:$true] %s30
      %s32 = sshll.u32 [#allocation5], 4
      %s33 = int_to_ptr.vmem [resolvable:$true] %s32
      %38 = dma.hbm_to_vmem [thread:$0]  %s31, 512, %s33, [#allocation6], 128, 128, 8
    $region9: #{forward.1} parent=1 // pred_fallthru
      _
    // Predicated region
    $region10: #{forward.1} parent=1 // pred_check
      _
    $region11: #{forward.1} parent=1 // pred_check_branch
      %40 = sbr.rel (0) target = $region13
    $region12: #{forward.1} parent=1 // pred_region
      _
    $region13: #{forward.1} parent=1 // pred_fallthru
      _
    // Predicated region
    $region14: #{forward.1} parent=1 // pred_check
      _
    $region15: #{forward.1} parent=1 // pred_check_branch
      %42 = sbr.rel (0) target = $region17
    $region16: #{forward.1} parent=1 // pred_region
      %44 = vsyncadd [#allocation6], 0
      %s45 = sshll.u32 %s3, 4
      %s46 = int_to_ptr.hbm [resolvable:$true] %s45
      %s47 = sshll.u32 [#allocation7], 4
      %s48 = int_to_ptr.vmem [resolvable:$true] %s47
      %53 = dma.hbm_to_vmem [thread:$0]  %s46, 1024, %s48, [#allocation6], 128, 128, 8
    $region17: #{forward.1} parent=1 // pred_fallthru
      _
    // Predicated region
    $region18: #{forward.1} parent=1 // pred_check
      _
    $region19: #{forward.1} parent=1 // pred_check_branch
      %55 = sbr.rel (0) target = $region21
    $region20: #{forward.1} parent=1 // pred_region
      _
    $region21: #{forward.1} parent=1 // pred_fallthru
      _
    // Predicated region
    $region22: #{forward.1} parent=1 // pred_check
      _
    $region23: #{forward.1} parent=1 // pred_check_branch
      %57 = sbr.rel (0) target = $region25
    $region24: #{forward.1} parent=1 // pred_region
      %59 = dma.done [#allocation3], 256
    $region25: #{forward.1} parent=1 // pred_fallthru
      _
    // Predicated region
    $region26: #{forward.1} parent=1 // pred_check
      _
    $region27: #{forward.1} parent=1 // pred_check_branch
      %61 = sbr.rel (0) target = $region29
    $region28: #{forward.1} parent=1 // pred_region
      %63 = dma.done [#allocation6], 512
    $region29: #{forward.1} parent=1 // pred_fallthru
      _
    // Predicated region
    $region30: #{forward.1} parent=1 // pred_check
      _
    $region31: #{forward.1} parent=1 // pred_check_branch
      %65 = sbr.rel (0) target = $region33
    $region32: #{forward.1} parent=1 // pred_region
      %67 = dma.done [#allocation6], 1024
    $region33: #{forward.1} parent=1 // pred_fallthru
      _
    %v68 = vld [vmem:[#allocation2] sm:$0xff]
    %v69 = vld [vmem:[#allocation2 + $0x8] sm:$0xff]
    %v70 = vld [vmem:[#allocation5] sm:$0xff]
    %v71 = vld [vmem:[#allocation5 + $0x8] sm:$0xff]
    %v72 = vld [vmem:[#allocation5 + $0x10] sm:$0xff]
    %v73 = vld [vmem:[#allocation5 + $0x18] sm:$0xff]
    %v74 = vld [vmem:[%s2] sm:$0x1]
    %v76 = vperm.slane %v74, 0
    %vm78 = vcmask 261120
    %v80 = vsel %vm78, %v68, 0
    %v83 = vsel %vm78, %v69, 0
    %85 = vmatpush.msra.mxu0 0.0
    %86 = vmatpush.msra.mxu0 0.0
    %87 = vmatpush.msra.mxu0 0.0
    %88 = vmatpush.msra.mxu0 0.0
    %89 = vmatpush.msra.mxu0 0.0
    %90 = vmatpush.msra.mxu0 0.0
    %91 = vmatpush.msra.mxu0 0.0
    %92 = vmatpush.msra.mxu0 0.0
    %93 = vmatpush.msra.mxu0 0.0
    %94 = vmatpush.msra.mxu0 0.0
    %95 = vmatpush.msra.mxu0 0.0
    %96 = vmatpush.msra.mxu0 0.0
    %97 = vmatpush.msra.mxu0 %v73
    %98 = vmatpush.msra.mxu0 %v72
    %99 = vmatpush.msra.mxu0 %v71
    %100 = vmatpush.msra.mxu0 %v70
    %101 = vmatmul.f32.gmra.mxu0 %v80
    %v102 = vpop.f32.mrf.mxu0
    %v103 = vadd.f32 %v76, %v102
    %104 = vmatmul.f32.gmra.mxu0 %v83
    %v105 = vpop.f32.mrf.mxu0
    %v106 = vadd.f32 %v76, %v105
    %107 = vdwg.mxu0
    %v108 = vmax.f32 %v103, 0.0
    %v109 = vmax.f32 %v106, 0.0
    %v110 = vld [vmem:[#allocation7] sm:$0xff]
    %v111 = vld [vmem:[#allocation7 + $0x8] sm:$0xff]
    %v112 = vld [vmem:[#allocation7 + $0x10] sm:$0xff]
    %v113 = vld [vmem:[#allocation7 + $0x18] sm:$0xff]
    %v114 = vld [vmem:[#allocation7 + $0x20] sm:$0xff]
    %v115 = vld [vmem:[#allocation7 + $0x28] sm:$0xff]
    %v116 = vld [vmem:[#allocation7 + $0x30] sm:$0xff]
    %v117 = vld [vmem:[#allocation7 + $0x38] sm:$0xff]
    %v118 = vld [vmem:[%s4] sm:$0x1]
    %v120 = vperm.slane %v118, 0
    %vm122 = vcmask 523264
    %v124 = vsel %vm122, %v108, 0
    %v127 = vsel %vm122, %v109, 0
    %129 = vmatpush.msra.mxu0 0.0
    %130 = vmatpush.msra.mxu0 0.0
    %131 = vmatpush.msra.mxu0 0.0
    %132 = vmatpush.msra.mxu0 0.0
    %133 = vmatpush.msra.mxu0 0.0
    %134 = vmatpush.msra.mxu0 0.0
    %135 = vmatpush.msra.mxu0 0.0
    %136 = vmatpush.msra.mxu0 0.0
    %137 = vmatpush.msra.mxu0 %v117
    %138 = vmatpush.msra.mxu0 %v116
    %139 = vmatpush.msra.mxu0 %v115
    %140 = vmatpush.msra.mxu0 %v114
    %141 = vmatpush.msra.mxu0 %v113
    %142 = vmatpush.msra.mxu0 %v112
    %143 = vmatpush.msra.mxu0 %v111
    %144 = vmatpush.msra.mxu0 %v110
    %145 = vmatmul.f32.gmra.mxu0 %v124
    %v146 = vpop.f32.mrf.mxu0
    %v147 = vadd.f32 %v120, %v146
    %148 = vmatmul.f32.gmra.mxu0 %v127
    %v149 = vpop.f32.mrf.mxu0
    %v150 = vadd.f32 %v120, %v149
    %151 = vdwg.mxu0
    %v152 = vadd.f32 %v147, %v68
    %v153 = vadd.f32 %v150, %v69
    %v154 = vmax.f32 %v152, 0.0
    %v155 = vmax.f32 %v153, 0.0
    %156 = vst.msk [vmem:[#allocation8] sm:$0xff] %vm78, %v154
    %157 = vst.msk [vmem:[#allocation8 + $0x8] sm:$0xff] %vm78, %v155
    // Predicated region
    $region34: #{forward.1} parent=1 // pred_check
      _
    $region35: #{forward.1} parent=1 // pred_check_branch
      %159 = sbr.rel (0) target = $region37
    $region36: #{forward.1} parent=1 // pred_region
      %161 = vsyncadd [#allocation4], 0
      %s162 = sshll.u32 [#allocation8], 4
      %s163 = int_to_ptr.vmem [resolvable:$true] %s162
      %s164 = sshll.u32 %s5, 4
      %s165 = int_to_ptr.hbm [resolvable:$true] %s164
      %170 = dma.vmem_to_hbm [thread:$0]  %s163, 256, %s165, [#allocation4], 128, 128, 8
    $region37: #{forward.1} parent=1 // pred_fallthru
      _
    // Predicated region
    $region38: #{forward.1} parent=1 // pred_check
      _
    $region39: #{forward.1} parent=1 // pred_check_branch
      %172 = sbr.rel (0) target = $region41
    $region40: #{forward.1} parent=1 // pred_region
      %174 = dma.done [#allocation4], 256
    $region41: #{forward.1} parent=1 // pred_fallthru
      _
    %175 = vsyncpa [#allocation3], 1
    %176 = vsyncpa [#allocation6], 1
    %177 = vsyncpa [#allocation4], 1

</llo_original>
